<compile_context>
chip_gen: v6e
topology: v6e:2x2x1
jax: 0.10.0
libtpu: 0.0.40
codegen_flags: <defaults>
</compile_context>

<pallas_src>
import math
import functools

import jax
import jax.numpy as jnp
from jax.experimental import pallas as pl
from jax.experimental.pallas import tpu as pltpu


_INV_SQRT2 = 1.0 / math.sqrt(2.0)
_SQRT_2_OVER_PI = math.sqrt(2.0 / math.pi)


def _gelu_f32(h, approximate):
    if approximate:
        # tanh approximation routes through the EUP slot (hidden under matmuls)
        return 0.5 * h * (1.0 + jnp.tanh(_SQRT_2_OVER_PI * (h + 0.044715 * h * h * h)))
    # exact erf-based GELU (matches torch.nn.GELU() default)
    return 0.5 * h * (1.0 + jax.lax.erf(h * _INV_SQRT2))


def _ffn_kernel(x_ref, w1_ref, b1_ref, w2_ref, b2_ref, o_ref, acc_ref,
                *, approximate_gelu):
    # x_ref:  (tm, d_model)       w1_ref: (d_model, tff)   b1_ref: (1, tff)
    # w2_ref: (tff, d_model)      b2_ref: (1, d_model)
    # o_ref:  (tm, d_model)       acc_ref: (tm, d_model) f32 scratch
    k = pl.program_id(1)

    @pl.when(k == 0)
    def _():
        acc_ref[...] = jnp.zeros_like(acc_ref)

    # first matmul + bias + GELU on this d_ff chunk, all in f32
    h = jnp.dot(x_ref[...], w1_ref[...], preferred_element_type=jnp.float32)
    h = h + b1_ref[...]
    h = _gelu_f32(h, approximate_gelu)

    # second matmul: accumulate this chunk's contribution
    acc_ref[...] += jnp.dot(h.astype(w2_ref.dtype), w2_ref[...],
                            preferred_element_type=jnp.float32)

    @pl.when(k == pl.num_programs(1) - 1)
    def _():
        o_ref[...] = (acc_ref[...] + b2_ref[...]).astype(o_ref.dtype)


def _round_up(a, b):
    return (a + b - 1) // b * b


def feed_forward(x, w1, b1, w2, b2, *, tm=256, tff=512,
                 compute_dtype=jnp.bfloat16, approximate_gelu=False):
    """FeedForward: GELU(x @ W1 + b1) @ W2 + b2.

    x: (batch, seq, d_model).  w1: (d_model, d_ff), w2: (d_ff, d_model)
    (i.e. y = x @ W, equivalent to PyTorch's x @ W.T with W (out, in)).
    """
    batch, seq, d_model = x.shape
    d_ff = w1.shape[1]
    out_dtype = x.dtype
    M = batch * seq

    # --- row tile: multiple of 8, no larger than (padded) M ---
    tm_eff = max(8, min(_round_up(tm, 8), _round_up(M, 8)))
    M_pad = _round_up(M, tm_eff)

    # --- d_ff tile: full d_ff, or a multiple of 128 (with d_ff zero-padded) ---
    if tff >= d_ff:
        tff_eff = d_ff
        dff_pad = d_ff
    else:
        tff_eff = min(_round_up(tff, 128), _round_up(d_ff, 128))
        dff_pad = _round_up(d_ff, tff_eff)

    # --- prepare operands (flatten, cast, pad) ---
    x2d = x.reshape(M, d_model).astype(compute_dtype)
    if M_pad > M:
        x2d = jnp.pad(x2d, ((0, M_pad - M), (0, 0)))

    w1c = w1.astype(compute_dtype)
    w2c = w2.astype(compute_dtype)
    b1f = b1.astype(jnp.float32)
    b2f = b2.astype(jnp.float32).reshape(1, d_model)
    if dff_pad > d_ff:
        # zero-padded d_ff columns/rows contribute exactly 0 (GELU(0)=0)
        w1c = jnp.pad(w1c, ((0, 0), (0, dff_pad - d_ff)))
        b1f = jnp.pad(b1f, ((0, dff_pad - d_ff),))
        w2c = jnp.pad(w2c, ((0, dff_pad - d_ff), (0, 0)))
    b1f = b1f.reshape(1, dff_pad)

    grid = (M_pad // tm_eff, dff_pad // tff_eff)

    # --- VMEM budget (double-buffered inputs/outputs + f32 accumulator) ---
    csize = jnp.dtype(compute_dtype).itemsize
    osize = jnp.dtype(out_dtype).itemsize
    tile_bytes = (
        2 * tm_eff * d_model * csize          # x tile
        + 2 * d_model * tff_eff * csize       # W1 tile
        + 2 * tff_eff * 4                     # b1 tile
        + 2 * tff_eff * d_model * csize       # W2 tile
        + 2 * d_model * 4                     # b2
        + 2 * tm_eff * d_model * osize        # output tile
        + tm_eff * d_model * 4                # f32 accumulator scratch
        + tm_eff * tff_eff * 4                # f32 hidden chunk (vreg/VMEM headroom)
    )
    vmem_limit_bytes = int(min(max(2 * tile_bytes, 32 << 20), 64 << 20))

    cost = pl.CostEstimate(
        flops=4 * M * d_model * d_ff,          # two matmuls
        transcendentals=M * d_ff,              # erf / tanh
        bytes_accessed=(M * d_model * csize + d_model * d_ff * csize
                        + d_ff * d_model * csize + d_ff * 4 + d_model * 4
                        + M * d_model * osize),
    )

    kernel = functools.partial(_ffn_kernel, approximate_gelu=approximate_gelu)

    out2d = pl.pallas_call(
        kernel,
        out_shape=jax.ShapeDtypeStruct((M_pad, d_model), out_dtype),
        grid_spec=pltpu.PrefetchScalarGridSpec(
            num_scalar_prefetch=0,
            grid=grid,
            in_specs=[
                pl.BlockSpec((tm_eff, d_model), lambda i, k: (i, 0)),   # x tile
                pl.BlockSpec((d_model, tff_eff), lambda i, k: (0, k)),  # W1 chunk
                pl.BlockSpec((1, tff_eff), lambda i, k: (0, k)),        # b1 chunk
                pl.BlockSpec((tff_eff, d_model), lambda i, k: (k, 0)),  # W2 chunk
                pl.BlockSpec((1, d_model), lambda i, k: (0, 0)),        # b2
            ],
            out_specs=pl.BlockSpec((tm_eff, d_model), lambda i, k: (i, 0)),
            scratch_shapes=[pltpu.VMEM((tm_eff, d_model), jnp.float32)],
        ),
        compiler_params=pltpu.CompilerParams(
            dimension_semantics=("parallel", "arbitrary"),
            vmem_limit_bytes=vmem_limit_bytes,
        ),
        cost_estimate=cost,
    )(x2d, w1c, b1f, w2c, b2f)

    return out2d[:M].reshape(batch, seq, d_model)


def init_params(key, d_model, d_ff):
    """Deterministic init mimicking nn.Linear defaults (uniform +/- 1/sqrt(fan_in))."""
    k1, k2, k3, k4 = jax.random.split(key, 4)
    lim1 = 1.0 / math.sqrt(d_model)
    lim2 = 1.0 / math.sqrt(d_ff)
    w1 = jax.random.uniform(k1, (d_model, d_ff), jnp.float32, -lim1, lim1)
    b1 = jax.random.uniform(k2, (d_ff,), jnp.float32, -lim1, lim1)
    w2 = jax.random.uniform(k3, (d_ff, d_model), jnp.float32, -lim2, lim2)
    b2 = jax.random.uniform(k4, (d_model,), jnp.float32, -lim2, lim2)
    return w1, b1, w2, b2


if __name__ == "__main__":
    key = jax.random.PRNGKey(0)
    kx, kp = jax.random.split(key)

    # Small but lane-dense shapes (d_model multiple of 128); tff=256 < d_ff=512
    # exercises the d_ff streaming / accumulator path (2 reduction steps).
    batch, seq, d_model, d_ff = 2, 8, 128, 512
    x = jax.random.normal(kx, (batch, seq, d_model), jnp.float32)
    w1, b1, w2, b2 = init_params(kp, d_model, d_ff)

    # exact f32 reference in plain JAX
    h_ref = x.reshape(-1, d_model) @ w1 + b1
    h_ref = 0.5 * h_ref * (1.0 + jax.lax.erf(h_ref / math.sqrt(2.0)))
    ref = (h_ref @ w2 + b2).reshape(batch, seq, d_model)

    # f32 compute path (tight-ish check)
    out_f32 = feed_forward(x, w1, b1, w2, b2, tm=256, tff=256,
                           compute_dtype=jnp.float32)
    out_f32 = jax.block_until_ready(out_f32)
    err_f32 = float(jnp.max(jnp.abs(out_f32 - ref)))
    assert err_f32 < 1e-2, f"f32 path mismatch vs reference (max abs err {err_f32})"

    # default bf16 fast path (looser check: bf16 weight/activation rounding)
    out_bf16 = feed_forward(x, w1, b1, w2, b2, tm=256, tff=256)
    out_bf16 = jax.block_until_ready(out_bf16)
    err_bf16 = float(jnp.max(jnp.abs(out_bf16 - ref)))
    assert err_bf16 < 5e-2, f"bf16 path mismatch vs reference (max abs err {err_bf16})"

    print("KERNEL_OK")
</pallas_src>

<mosaic_0001>
module attributes {stable_mosaic.version = 11 : i64} {
  func.func @_ffn_kernel(%arg0: i32, %arg1: i32, %arg2: memref<16x128xf32, #tpu.memory_space<vmem>>, %arg3: memref<128x256xf32, #tpu.memory_space<vmem>>, %arg4: memref<1x256xf32, #tpu.memory_space<vmem>>, %arg5: memref<256x128xf32, #tpu.memory_space<vmem>>, %arg6: memref<1x128xf32, #tpu.memory_space<vmem>>, %arg7: memref<16x128xf32, #tpu.memory_space<vmem>>, %arg8: memref<16x128xf32, #tpu.memory_space<vmem>>) attributes {dimension_semantics = [#tpu.dimension_semantics<parallel>, #tpu.dimension_semantics<arbitrary>], iteration_bounds = array<i64: 1, 2>, scalar_prefetch = 0 : i64, scratch_operands = 1 : i64, tpu.core_type = #tpu.core_type<tc>, window_params = [{transform_indices = @transform_0, window_bounds = array<i64: 16, 128>}, {transform_indices = @transform_1, window_bounds = array<i64: 128, 256>}, {transform_indices = @transform_2, window_bounds = array<i64: 1, 256>}, {transform_indices = @transform_3, window_bounds = array<i64: 256, 128>}, {pipeline_mode = #tpu.pipeline_mode<synchronous>, transform_indices = @transform_4, window_bounds = array<i64: 1, 128>}, {transform_indices = @transform_5, window_bounds = array<i64: 16, 128>}]} {
    %c0_i32 = arith.constant 0 : i32
    %0 = arith.cmpi eq, %arg1, %c0_i32 : i32
    %1 = arith.extui %0 : i1 to i32
    %c0_i32_0 = arith.constant 0 : i32
    %2 = arith.cmpi ne, %1, %c0_i32_0 : i32
    scf.if %2 {
      %cst_17 = arith.constant 0.000000e+00 : f32
      %25 = vector.broadcast %cst_17 : f32 to vector<16x128xf32>
      %c0_18 = arith.constant 0 : index
      %c0_19 = arith.constant 0 : index
      %26 = vector.load %arg8[%c0_18, %c0_19] : memref<16x128xf32, #tpu.memory_space<vmem>>, vector<16x128xf32>
      tpu.vector_store %arg8[%c0_18, %c0_19], %25 {strides = array<i32>} : memref<16x128xf32, #tpu.memory_space<vmem>>, vector<16x128xf32>,
    } else {
    }
    %c0 = arith.constant 0 : index
    %c0_1 = arith.constant 0 : index
    %3 = vector.load %arg2[%c0, %c0_1] : memref<16x128xf32, #tpu.memory_space<vmem>>, vector<16x128xf32>
    %c0_2 = arith.constant 0 : index
    %c0_3 = arith.constant 0 : index
    %4 = vector.load %arg3[%c0_2, %c0_3] : memref<128x256xf32, #tpu.memory_space<vmem>>, vector<128x256xf32>
    %cst = arith.constant dense<0.000000e+00> : vector<16x256xf32>
    %5 = tpu.matmul %3, %4, %cst {dimension_numbers = #tpu.dot_dimension_numbers<[1], [0], [0], [1], [0, 0, 1, 1], [], []>} : vector<16x128xf32>, vector<128x256xf32>, vector<16x256xf32> -> vector<16x256xf32>
    %c0_4 = arith.constant 0 : index
    %c0_5 = arith.constant 0 : index
    %6 = vector.load %arg4[%c0_4, %c0_5] : memref<1x256xf32, #tpu.memory_space<vmem>>, vector<1x256xf32>
    %7 = vector.broadcast %6 : vector<1x256xf32> to vector<16x256xf32>
    %8 = arith.addf %5, %7 : vector<16x256xf32>
    %cst_6 = arith.constant 5.000000e-01 : f32
    %9 = vector.broadcast %cst_6 : f32 to vector<16x256xf32>
    %10 = arith.mulf %9, %8 : vector<16x256xf32>
    %cst_7 = arith.constant 0.707106769 : f32
    %11 = vector.broadcast %cst_7 : f32 to vector<16x256xf32>
    %12 = arith.mulf %8, %11 : vector<16x256xf32>
    %13 = math.erf %12 : vector<16x256xf32>
    %cst_8 = arith.constant 1.000000e+00 : f32
    %14 = vector.broadcast %cst_8 : f32 to vector<16x256xf32>
    %15 = arith.addf %14, %13 : vector<16x256xf32>
    %16 = arith.mulf %10, %15 : vector<16x256xf32>
    %c0_9 = arith.constant 0 : index
    %c0_10 = arith.constant 0 : index
    %17 = vector.load %arg8[%c0_9, %c0_10] : memref<16x128xf32, #tpu.memory_space<vmem>>, vector<16x128xf32>
    %c0_11 = arith.constant 0 : index
    %c0_12 = arith.constant 0 : index
    %18 = vector.load %arg5[%c0_11, %c0_12] : memref<256x128xf32, #tpu.memory_space<vmem>>, vector<256x128xf32>
    %cst_13 = arith.constant dense<0.000000e+00> : vector<16x128xf32>
    %19 = tpu.matmul %16, %18, %cst_13 {dimension_numbers = #tpu.dot_dimension_numbers<[1], [0], [0], [1], [0, 0, 1, 1], [], []>} : vector<16x256xf32>, vector<256x128xf32>, vector<16x128xf32> -> vector<16x128xf32>
    %20 = arith.addf %17, %19 : vector<16x128xf32>
    %c0_14 = arith.constant 0 : index
    %c0_15 = arith.constant 0 : index
    %21 = vector.load %arg8[%c0_14, %c0_15] : memref<16x128xf32, #tpu.memory_space<vmem>>, vector<16x128xf32>
    tpu.vector_store %arg8[%c0_14, %c0_15], %20 {strides = array<i32>} : memref<16x128xf32, #tpu.memory_space<vmem>>, vector<16x128xf32>,
    %c1_i32 = arith.constant 1 : i32
    %22 = arith.cmpi eq, %arg1, %c1_i32 : i32
    %23 = arith.extui %22 : i1 to i32
    %c0_i32_16 = arith.constant 0 : i32
    %24 = arith.cmpi ne, %23, %c0_i32_16 : i32
    scf.if %24 {
      %c0_17 = arith.constant 0 : index
      %c0_18 = arith.constant 0 : index
      %25 = vector.load %arg8[%c0_17, %c0_18] : memref<16x128xf32, #tpu.memory_space<vmem>>, vector<16x128xf32>
      %c0_19 = arith.constant 0 : index
      %c0_20 = arith.constant 0 : index
      %26 = vector.load %arg6[%c0_19, %c0_20] : memref<1x128xf32, #tpu.memory_space<vmem>>, vector<1x128xf32>
      %27 = vector.broadcast %26 : vector<1x128xf32> to vector<16x128xf32>
      %28 = arith.addf %25, %27 : vector<16x128xf32>
      %c0_21 = arith.constant 0 : index
      %c0_22 = arith.constant 0 : index
      %29 = vector.load %arg7[%c0_21, %c0_22] : memref<16x128xf32, #tpu.memory_space<vmem>>, vector<16x128xf32>
      tpu.vector_store %arg7[%c0_21, %c0_22], %28 {strides = array<i32>} : memref<16x128xf32, #tpu.memory_space<vmem>>, vector<16x128xf32>,
    } else {
    }
    return
  }
  func.func @transform_0(%arg0: i32, %arg1: i32) -> (i32, i32) {
    %c0_i32 = arith.constant 0 : i32
    %c0_i32_0 = arith.constant 0 : i32
    return %arg0, %c0_i32 : i32, i32
  }
  func.func @transform_1(%arg0: i32, %arg1: i32) -> (i32, i32) {
    %c0_i32 = arith.constant 0 : i32
    %c0_i32_0 = arith.constant 0 : i32
    return %c0_i32, %arg1 : i32, i32
  }
  func.func @transform_2(%arg0: i32, %arg1: i32) -> (i32, i32) {
    %c0_i32 = arith.constant 0 : i32
    %c0_i32_0 = arith.constant 0 : i32
    return %c0_i32, %arg1 : i32, i32
  }
  func.func @transform_3(%arg0: i32, %arg1: i32) -> (i32, i32) {
    %c0_i32 = arith.constant 0 : i32
    %c0_i32_0 = arith.constant 0 : i32
    return %arg1, %c0_i32 : i32, i32
  }
  func.func @transform_4(%arg0: i32, %arg1: i32) -> (i32, i32) {
    %c0_i32 = arith.constant 0 : i32
    %c0_i32_0 = arith.constant 0 : i32
    %c0_i32_1 = arith.constant 0 : i32
    return %c0_i32, %c0_i32_0 : i32, i32
  }
  func.func @transform_5(%arg0: i32, %arg1: i32) -> (i32, i32) {
    %c0_i32 = arith.constant 0 : i32
    %c0_i32_0 = arith.constant 0 : i32
    return %arg0, %c0_i32 : i32, i32
  }
}

</mosaic_0001>

<llo_original>
// kernel: tpu_custom_call.1
$region0: #{tpu_custom_call.1}
  #allocation0 [shape = 'u32[]', space=smem, size = 0x4, offset = 0x4, fixed_abs, tag = 'smem constant byte address 0x4 - core index']
  #allocation1 [shape = 'u32[144,128]{1,0:T(1,128)}', space=vmem, size = 0x12000, scoped, tag = 'internal scratch']
  #allocation2 [shape = 'f32[16,128]{1,0:T(8,128)}', space=vmem, size = 0x2000, scoped, tag = 'scratch operand']
  %s0 = inlined_call_operand.hbm [shape: f32[16,128], index: 0, kind: input, shape index: {}]
  %s1 = inlined_call_operand.hbm [shape: f32[128,512], index: 1, kind: input, shape index: {}]
  %s2 = inlined_call_operand.hbm [shape: f32[1,512], index: 2, kind: input, shape index: {}]
  %s3 = inlined_call_operand.hbm [shape: f32[512,128], index: 3, kind: input, shape index: {}]
  %s4 = inlined_call_operand.vmem [shape: f32[1,128], index: 4, kind: input, shape index: {}]
  %s5 = inlined_call_operand.hbm [shape: f32[16,128], index: 5, kind: output, shape index: {}]
  %s6 = sld [smem:[#allocation0]]
  $region77: #{tpu_custom_call.1} parent=0
    _
  %s8 = ssub.s32 1, %s6
  %s9 = scalar_select 0, %s8, %s6
  $region1: #{tpu_custom_call.1} parent=0
    #allocation3 [shape = 'u8[8192]{0}', space=vmem, size = 0x2000, scoped, tag = 'input window, operand 0, single buffered']
    #allocation4 [shape = 's32[2]{0}', space=sflag, size = 0x8, scoped, tag = 'scoped memory for tpu_custom_call.1']
    #allocation5 [shape = 's32[2]{0}', space=sflag, size = 0x8, scoped, tag = 'scoped memory for tpu_custom_call.1']
    #allocation6 [shape = 'u8[262144]{0}', space=vmem, size = 0x40000, scoped, tag = 'input window, operand 1']
    #allocation7 [shape = 's32[2]{0}', space=sflag, size = 0x8, scoped, tag = 'scoped memory for tpu_custom_call.1']
    #allocation8 [shape = 'u8[2048]{0}', space=vmem, size = 0x800, scoped, tag = 'input window, operand 2']
    #allocation9 [shape = 'u8[262144]{0}', space=vmem, size = 0x40000, scoped, tag = 'input window, operand 3']
    #allocation10 [shape = 's32[2]{0}', space=sflag, size = 0x8, scoped, tag = 'scoped memory for tpu_custom_call.1']
    #allocation11 [shape = 'u8[8192]{0}', space=vmem, size = 0x2000, scoped, tag = 'output window, operand 0, single buffered']
    %10 = vsyncpa [#allocation4], 0
    %11 = vsyncpa [#allocation7], 0
    %s12 = scalar_lea.sflag [#allocation7], 1
    %13 = vsyncpa %s12, 0
    %14 = vsyncpa [#allocation10], 0
    %s15 = scalar_lea.sflag [#allocation10], 1
    %16 = vsyncpa %s15, 0
    %17 = vsyncpa [#allocation5], 0
    loop: start=0, step=1, limit=4
    $region2: #{tpu_custom_call.1} parent=1 // loop_pre_header
      _
    $region3: #{tpu_custom_call.1} parent=1 // loop_header
      %s19 = sphi 0, %s23
      %p20 = scmp.ge.s32.totalorder %s19, 4
      %s26 = sphi 0, %s38
      %s27 = sphi 0, %s34
      %s28 = sphi 0, %s26
      %s29 = sphi 0, %s27
      %s30 = sphi 0, %s28
      %s31 = sphi 0, %s29
      %s41 = sphi 0, %s43
      %s44 = sphi 0, %s41
      %s45 = sphi 0, %s44
      %s61 = sphi 0, %s45
      %s67 = sphi 0, %s69
      %s70 = sphi 0, %s67
      %s71 = sphi 0, %s70
      %s87 = sphi 0, %s71
      %s93 = sphi 0, %s95
      %s96 = sphi 0, %s93
      %s97 = sphi 0, %s96
      %s113 = sphi 0, %s97
      %s119 = sphi 0, %s121
      %s122 = sphi 0, %s119
      %s123 = sphi 0, %s122
      %s139 = sphi 0, %s123
      %s143 = sphi 0, %s143
      %s145 = sphi 0, %s143
      %s146 = sphi 0, %s145
      %s160 = sphi 0, %s146
      %s166 = sphi 0, %s168
      %s169 = sphi 0, %s166
      %s170 = sphi 0, %s169
      %s186 = sphi 0, %s170
    $region4: #{tpu_custom_call.1} parent=1 // loop_header_branch
      %22 = sbr.rel (%p20) target = $region8
    $region5: #{tpu_custom_call.1} parent=1 // loop_body
      %s24 = ssub.s32 %s19, 1
      %s25 = ssub.s32 %s19, 2
      %s32 = sadd.s32 1, %s27
      %p33 = scmp.ge.s32.totalorder %s32, 2
      %s34 = scalar_select %p33, 0, %s32
      %s35 = sadd.s32 1, %s26
      %s36 = scalar_select %p33, %s35, %s26
      %p37 = scmp.ge.s32.totalorder %s36, 1
      %s38 = scalar_select %p37, 0, %s36
      %s39 = ssub.s32 %s26, %s38
      %p40 = scmp.eq.s32.totalorder %s39, 0
      %s42 = sadd.s32 %s41, 1
      %s43 = scalar_select %p40, %s41, %s42
      %p46 = pneg %p40
      %p47 = scmp.eq.s32.totalorder %s19, 1
      %p48 = por %p46, %p47
      %p49 = scmp.ne.s32.totalorder %s41, %s44
      %p50 = scmp.eq.s32.totalorder %s19, 0
      %p51 = por %p49, %p50
      %p52 = scmp.ne.s32.totalorder %s41, %s44
      %p53 = scmp.eq.s32.totalorder %s24, 1
      %p54 = por %p52, %p53
      %p55 = scmp.ne.s32.totalorder %s44, %s45
      %p56 = scmp.eq.s32.totalorder %s24, 0
      %p57 = por %p55, %p56
      %p58 = scmp.ne.s32.totalorder %s44, %s45
      %p59 = scmp.eq.s32.totalorder %s25, 1
      %p60 = por %p58, %p59
      %p62 = scmp.ne.s32.totalorder %s45, %s61
      %p63 = scmp.eq.s32.totalorder %s25, 0
      %p64 = por %p62, %p63
      %s65 = ssub.s32 %s27, %s34
      %p66 = scmp.eq.s32.totalorder %s65, 0
      %s68 = sadd.s32 %s67, 1
      %s69 = scalar_select %p66, %s67, %s68
      %p72 = pneg %p66
      %p73 = scmp.eq.s32.totalorder %s19, 1
      %p74 = por %p72, %p73
      %p75 = scmp.ne.s32.totalorder %s67, %s70
      %p76 = scmp.eq.s32.totalorder %s19, 0
      %p77 = por %p75, %p76
      %p78 = scmp.ne.s32.totalorder %s67, %s70
      %p79 = scmp.eq.s32.totalorder %s24, 1
      %p80 = por %p78, %p79
      %p81 = scmp.ne.s32.totalorder %s70, %s71
      %p82 = scmp.eq.s32.totalorder %s24, 0
      %p83 = por %p81, %p82
      %p84 = scmp.ne.s32.totalorder %s70, %s71
      %p85 = scmp.eq.s32.totalorder %s25, 1
      %p86 = por %p84, %p85
      %p88 = scmp.ne.s32.totalorder %s71, %s87
      %p89 = scmp.eq.s32.totalorder %s25, 0
      %p90 = por %p88, %p89
      %s91 = ssub.s32 %s27, %s34
      %p92 = scmp.eq.s32.totalorder %s91, 0
      %s94 = sadd.s32 %s93, 1
      %s95 = scalar_select %p92, %s93, %s94
      %p98 = pneg %p92
      %p99 = scmp.eq.s32.totalorder %s19, 1
      %p100 = por %p98, %p99
      %p101 = scmp.ne.s32.totalorder %s93, %s96
      %p102 = scmp.eq.s32.totalorder %s19, 0
      %p103 = por %p101, %p102
      %p104 = scmp.ne.s32.totalorder %s93, %s96
      %p105 = scmp.eq.s32.totalorder %s24, 1
      %p106 = por %p104, %p105
      %p107 = scmp.ne.s32.totalorder %s96, %s97
      %p108 = scmp.eq.s32.totalorder %s24, 0
      %p109 = por %p107, %p108
      %p110 = scmp.ne.s32.totalorder %s96, %s97
      %p111 = scmp.eq.s32.totalorder %s25, 1
      %p112 = por %p110, %p111
      %p114 = scmp.ne.s32.totalorder %s97, %s113
      %p115 = scmp.eq.s32.totalorder %s25, 0
      %p116 = por %p114, %p115
      %s117 = ssub.s32 %s27, %s34
      %p118 = scmp.eq.s32.totalorder %s117, 0
      %s120 = sadd.s32 %s119, 1
      %s121 = scalar_select %p118, %s119, %s120
      %p124 = pneg %p118
      %p125 = scmp.eq.s32.totalorder %s19, 1
      %p126 = por %p124, %p125
      %p127 = scmp.ne.s32.totalorder %s119, %s122
      %p128 = scmp.eq.s32.totalorder %s19, 0
      %p129 = por %p127, %p128
      %p130 = scmp.ne.s32.totalorder %s119, %s122
      %p131 = scmp.eq.s32.totalorder %s24, 1
      %p132 = por %p130, %p131
      %p133 = scmp.ne.s32.totalorder %s122, %s123
      %p134 = scmp.eq.s32.totalorder %s24, 0
      %p135 = por %p133, %p134
      %p136 = scmp.ne.s32.totalorder %s122, %s123
      %p137 = scmp.eq.s32.totalorder %s25, 1
      %p138 = por %p136, %p137
      %p140 = scmp.ne.s32.totalorder %s123, %s139
      %p141 = scmp.eq.s32.totalorder %s25, 0
      %p142 = por %p140, %p141
      %s144 = sadd.s32 %s143, 1
      %p147 = scmp.eq.s32.totalorder %s19, 1
      %p148 = scmp.ne.s32.totalorder %s143, %s145
      %p149 = scmp.eq.s32.totalorder %s19, 0
      %p150 = por %p148, %p149
      %p151 = scmp.ne.s32.totalorder %s143, %s145
      %p152 = scmp.eq.s32.totalorder %s24, 1
      %p153 = por %p151, %p152
      %p154 = scmp.ne.s32.totalorder %s145, %s146
      %p155 = scmp.eq.s32.totalorder %s24, 0
      %p156 = por %p154, %p155
      %p157 = scmp.ne.s32.totalorder %s145, %s146
      %p158 = scmp.eq.s32.totalorder %s25, 1
      %p159 = por %p157, %p158
      %p161 = scmp.ne.s32.totalorder %s146, %s160
      %p162 = scmp.eq.s32.totalorder %s25, 0
      %p163 = por %p161, %p162
      %s164 = ssub.s32 %s26, %s38
      %p165 = scmp.eq.s32.totalorder %s164, 0
      %s167 = sadd.s32 %s166, 1
      %s168 = scalar_select %p165, %s166, %s167
      %p171 = pneg %p165
      %p172 = scmp.eq.s32.totalorder %s19, 1
      %p173 = por %p171, %p172
      %p174 = scmp.ne.s32.totalorder %s166, %s169
      %p175 = scmp.eq.s32.totalorder %s19, 0
      %p176 = por %p174, %p175
      %p177 = scmp.ne.s32.totalorder %s166, %s169
      %p178 = scmp.eq.s32.totalorder %s24, 1
      %p179 = por %p177, %p178
      %p180 = scmp.ne.s32.totalorder %s169, %s170
      %p181 = scmp.eq.s32.totalorder %s24, 0
      %p182 = por %p180, %p181
      %p183 = scmp.ne.s32.totalorder %s169, %s170
      %p184 = scmp.eq.s32.totalorder %s25, 1
      %p185 = por %p183, %p184
      %p187 = scmp.ne.s32.totalorder %s170, %s186
      %p188 = scmp.eq.s32.totalorder %s25, 0
      %p189 = por %p187, %p188
      %p190 = scmp.le.s32.totalorder 1, %s19
      %p191 = scmp.lt.s32.totalorder %s19, 3
      %p192 = pnand %p190, %p191
      %p193 = pneg %p192
      // Predicated region
      $region9: #{tpu_custom_call.1} parent=5 // pred_check
        _
      $region10: #{tpu_custom_call.1} parent=5 // pred_check_branch
        %195 = sbr.rel (%p192) target = $region12
      $region11: #{tpu_custom_call.1} parent=5 // pred_region
        %s196 = ssub.s32 %s19, 1
        // Predicated region
        $region13: #{tpu_custom_call.1} parent=11 // pred_check
          %p197 = pneg %p57
        $region14: #{tpu_custom_call.1} parent=11 // pred_check_branch
          %199 = sbr.rel (%p197) target = $region16
        $region15: #{tpu_custom_call.1} parent=11 // pred_region
          %s200 = smul.u32 2, %s28
          %s202 = ssub.s32 256, 256
          %203 = vsyncadd [#allocation4], %s202
          %s204 = smul.addr %s200, 128
          %s205 = scalar_lea.hbm %s0, %s204
          %s206 = sshll.u32 [#allocation3], 4
          %s207 = int_to_ptr.vmem [resolvable:$true] %s206
          %212 = dma.hbm_to_vmem [thread:$0]  %s205, 256, %s207, [#allocation4], 128, 128, 8
        $region16: #{tpu_custom_call.1} parent=11 // pred_fallthru
          _
        // Predicated region
        $region17: #{tpu_custom_call.1} parent=11 // pred_check
          %p213 = pneg %p156
        $region18: #{tpu_custom_call.1} parent=11 // pred_check_branch
          %215 = sbr.rel (%p213) target = $region20
        $region19: #{tpu_custom_call.1} parent=11 // pred_region
          _
        $region20: #{tpu_custom_call.1} parent=11 // pred_fallthru
          _
      $region12: #{tpu_custom_call.1} parent=5 // pred_fallthru
        _
      %p216 = scmp.lt.s32.totalorder %s19, 2
      // Predicated region
      $region21: #{tpu_custom_call.1} parent=5 // pred_check
        %p217 = pneg %p216
      $region22: #{tpu_custom_call.1} parent=5 // pred_check_branch
        %219 = sbr.rel (%p217) target = $region24
      $region23: #{tpu_custom_call.1} parent=5 // pred_region
        // Predicated region
        $region25: #{tpu_custom_call.1} parent=23 // pred_check
          %p220 = pneg %p77
        $region26: #{tpu_custom_call.1} parent=23 // pred_check_branch
          %222 = sbr.rel (%p220) target = $region28
        $region27: #{tpu_custom_call.1} parent=23 // pred_region
          %s223 = sand.u32 %s19, 1
          %s224 = scalar_lea.sflag [#allocation7], %s223
          %s225 = sand.u32 %s67, 1
          %s226 = smul.addr %s225, 256
          %s227 = scalar_lea.vmem [#allocation6], %s226
          %s228 = smul.u32 2, %s27
          %s230 = ssub.s32 4096, 4096
          %231 = vsyncadd %s224, %s230
          %s232 = smul.addr %s228, 128
          %s233 = scalar_lea.hbm %s1, %s232
          %s234 = sshll.u32 %s227, 4
          %s235 = int_to_ptr.vmem [resolvable:$true] %s234
          %240 = dma.hbm_to_vmem [thread:$0]  %s233, 4096, %s235, %s224, 512, 256, 16
        $region28: #{tpu_custom_call.1} parent=23 // pred_fallthru
          _
        // Predicated region
        $region29: #{tpu_custom_call.1} parent=23 // pred_check
          %p241 = pneg %p103
        $region30: #{tpu_custom_call.1} parent=23 // pred_check_branch
          %243 = sbr.rel (%p241) target = $region32
        $region31: #{tpu_custom_call.1} parent=23 // pred_region
          %s244 = sand.u32 %s19, 1
          %s245 = scalar_lea.sflag [#allocation7], %s244
          %s246 = sand.u32 %s93, 1
          %s247 = smul.addr %s246, 2
          %s248 = scalar_lea.vmem [#allocation8], %s247
          %s249 = smul.u32 2, %s27
          %s251 = ssub.s32 32, 32
          %252 = vsyncadd %s245, %s251
          %s253 = smul.addr %s249, 16
          %s254 = scalar_lea.hbm %s2, %s253
          %s256 = sshll.u32 %s248, 4
          %s257 = int_to_ptr.vmem [resolvable:$true] %s256
          %259 = dma.hbm_to_vmem [thread:$0]  %s254, 32, %s257, %s245
        $region32: #{tpu_custom_call.1} parent=23 // pred_fallthru
          _
        // Predicated region
        $region33: #{tpu_custom_call.1} parent=23 // pred_check
          %p260 = pneg %p129
        $region34: #{tpu_custom_call.1} parent=23 // pred_check_branch
          %262 = sbr.rel (%p260) target = $region36
        $region35: #{tpu_custom_call.1} parent=23 // pred_region
          %s263 = sand.u32 %s119, 1
          %s264 = scalar_lea.sflag [#allocation10], %s263
          %s265 = sand.u32 %s119, 1
          %s266 = smul.addr %s265, 256
          %s267 = scalar_lea.vmem [#allocation9], %s266
          %s268 = smul.u32 32, %s27
          %s270 = ssub.s32 4096, 4096
          %271 = vsyncadd %s264, %s270
          %s272 = smul.addr %s268, 128
          %s273 = scalar_lea.hbm %s3, %s272
          %s274 = sshll.u32 %s267, 4
          %s275 = int_to_ptr.vmem [resolvable:$true] %s274
          %280 = dma.hbm_to_vmem [thread:$0]  %s273, 4096, %s275, %s264, 128, 128, 8
        $region36: #{tpu_custom_call.1} parent=23 // pred_fallthru
          _
      $region24: #{tpu_custom_call.1} parent=5 // pred_fallthru
        _
      %p281 = scmp.le.s32.totalorder 1, %s19
      %p282 = scmp.lt.s32.totalorder %s19, 3
      %p283 = pnand %p281, %p282
      %p284 = pneg %p283
      // Predicated region
      $region37: #{tpu_custom_call.1} parent=5 // pred_check
        _
      $region38: #{tpu_custom_call.1} parent=5 // pred_check_branch
        %286 = sbr.rel (%p283) target = $region40
      $region39: #{tpu_custom_call.1} parent=5 // pred_region
        %s287 = ssub.s32 %s19, 1
        // Predicated region
        $region41: #{tpu_custom_call.1} parent=39 // pred_check
          %p288 = pneg %p57
        $region42: #{tpu_custom_call.1} parent=39 // pred_check_branch
          %290 = sbr.rel (%p288) target = $region44
        $region43: #{tpu_custom_call.1} parent=39 // pred_region
          %291 = dma.done [#allocation4], 256
        $region44: #{tpu_custom_call.1} parent=39 // pred_fallthru
          _
        %s292 = sand.u32 %s24, 1
        %s293 = scalar_lea.sflag [#allocation7], %s292
        %s294 = sand.u32 %s70, 1
        %s295 = smul.addr %s294, 256
        %s296 = scalar_lea.vmem [#allocation6], %s295
        // Predicated region
        $region45: #{tpu_custom_call.1} parent=39 // pred_check
          %p297 = pneg %p83
        $region46: #{tpu_custom_call.1} parent=39 // pred_check_branch
          %299 = sbr.rel (%p297) target = $region48
        $region47: #{tpu_custom_call.1} parent=39 // pred_region
          %300 = dma.done %s293, 4096
        $region48: #{tpu_custom_call.1} parent=39 // pred_fallthru
          _
        %s301 = sand.u32 %s24, 1
        %s302 = scalar_lea.sflag [#allocation7], %s301
        %s303 = sand.u32 %s96, 1
        %s304 = smul.addr %s303, 2
        %s305 = scalar_lea.vmem [#allocation8], %s304
        // Predicated region
        $region49: #{tpu_custom_call.1} parent=39 // pred_check
          %p306 = pneg %p109
        $region50: #{tpu_custom_call.1} parent=39 // pred_check_branch
          %308 = sbr.rel (%p306) target = $region52
        $region51: #{tpu_custom_call.1} parent=39 // pred_region
          %309 = dma.done %s302, 32
        $region52: #{tpu_custom_call.1} parent=39 // pred_fallthru
          _
        %s310 = sand.u32 %s122, 1
        %s311 = scalar_lea.sflag [#allocation10], %s310
        %s312 = sand.u32 %s122, 1
        %s313 = smul.addr %s312, 256
        %s314 = scalar_lea.vmem [#allocation9], %s313
        // Predicated region
        $region53: #{tpu_custom_call.1} parent=39 // pred_check
          %p315 = pneg %p135
        $region54: #{tpu_custom_call.1} parent=39 // pred_check_branch
          %317 = sbr.rel (%p315) target = $region56
        $region55: #{tpu_custom_call.1} parent=39 // pred_region
          %318 = dma.done %s311, 4096
        $region56: #{tpu_custom_call.1} parent=39 // pred_fallthru
          _
        %p319 = pneg %p57
        %p320 = pneg %p54
        %s321 = sand.u32 %s24, 1
        %s322 = scalar_lea.sflag [#allocation7], %s321
        %s323 = sand.u32 %s70, 1
        %s324 = smul.addr %s323, 256
        %s325 = scalar_lea.vmem [#allocation6], %s324
        %p326 = pneg %p83
        %p327 = pneg %p80
        %s328 = sand.u32 %s24, 1
        %s329 = scalar_lea.sflag [#allocation7], %s328
        %s330 = sand.u32 %s96, 1
        %s331 = smul.addr %s330, 2
        %s332 = scalar_lea.vmem [#allocation8], %s331
        %p333 = pneg %p109
        %p334 = pneg %p106
        %s335 = sand.u32 %s122, 1
        %s336 = scalar_lea.sflag [#allocation10], %s335
        %s337 = sand.u32 %s122, 1
        %s338 = smul.addr %s337, 256
        %s339 = scalar_lea.vmem [#allocation9], %s338
        %p340 = pneg %p135
        %p341 = pneg %p132
        %p342 = pneg %p156
        %p343 = pneg %p153
        %p344 = pneg %p182
        %p345 = pneg %p179
        %s346 = smul.u32 2, %s28
        %s347 = smul.u32 2, %s29
        %s348 = smul.u32 2, %s29
        %s349 = smul.u32 32, %s29
        %s350 = smul.u32 2, %s28
        %p351 = scmp.eq.s32.totalorder %s29, 0
        // Predicated region
        $region57: #{tpu_custom_call.1} parent=39 // pred_check
          %p352 = pneg %p351
        $region58: #{tpu_custom_call.1} parent=39 // pred_check_branch
          %354 = sbr.rel (%p352) target = $region60
        $region59: #{tpu_custom_call.1} parent=39 // pred_region
          %355 = vst [vmem:[#allocation2] sm:$0xff] 0.0
          %356 = vst [vmem:[#allocation2 + $0x8] sm:$0xff] 0.0
        $region60: #{tpu_custom_call.1} parent=39 // pred_fallthru
          _
        %v357 = vld [vmem:[#allocation3] sm:$0xff]
        %v358 = vld [vmem:[#allocation3 + $0x8] sm:$0xff]
        %v359 = vld [vmem:[%s296] sm:$0xff]
        %v360 = vld [vmem:[%s296 + $0x8] sm:$0xff]
        %v361 = vld [vmem:[%s296 + $0x10] sm:$0xff]
        %v362 = vld [vmem:[%s296 + $0x18] sm:$0xff]
        %v363 = vld [vmem:[%s296 + $0x20] sm:$0xff]
        %v364 = vld [vmem:[%s296 + $0x28] sm:$0xff]
        %v365 = vld [vmem:[%s296 + $0x30] sm:$0xff]
        %v366 = vld [vmem:[%s296 + $0x38] sm:$0xff]
        %v367 = vld [vmem:[%s296 + $0x40] sm:$0xff]
        %v368 = vld [vmem:[%s296 + $0x48] sm:$0xff]
        %v369 = vld [vmem:[%s296 + $0x50] sm:$0xff]
        %v370 = vld [vmem:[%s296 + $0x58] sm:$0xff]
        %v371 = vld [vmem:[%s296 + $0x60] sm:$0xff]
        %v372 = vld [vmem:[%s296 + $0x68] sm:$0xff]
        %v373 = vld [vmem:[%s296 + $0x70] sm:$0xff]
        %v374 = vld [vmem:[%s296 + $0x78] sm:$0xff]
        %v375 = vld [vmem:[%s296 + $0x80] sm:$0xff]
        %v376 = vld [vmem:[%s296 + $0x88] sm:$0xff]
        %v377 = vld [vmem:[%s296 + $0x90] sm:$0xff]
        %v378 = vld [vmem:[%s296 + $0x98] sm:$0xff]
        %v379 = vld [vmem:[%s296 + $0xa0] sm:$0xff]
        %v380 = vld [vmem:[%s296 + $0xa8] sm:$0xff]
        %v381 = vld [vmem:[%s296 + $0xb0] sm:$0xff]
        %v382 = vld [vmem:[%s296 + $0xb8] sm:$0xff]
        %v383 = vld [vmem:[%s296 + $0xc0] sm:$0xff]
        %v384 = vld [vmem:[%s296 + $0xc8] sm:$0xff]
        %v385 = vld [vmem:[%s296 + $0xd0] sm:$0xff]
        %v386 = vld [vmem:[%s296 + $0xd8] sm:$0xff]
        %v387 = vld [vmem:[%s296 + $0xe0] sm:$0xff]
        %v388 = vld [vmem:[%s296 + $0xe8] sm:$0xff]
        %v389 = vld [vmem:[%s296 + $0xf0] sm:$0xff]
        %v390 = vld [vmem:[%s296 + $0xf8] sm:$0xff]
        %v391 = vld [vmem:[%s305] sm:$0x3]
        %v393 = vlaneseq
        %v394 = vshrl.u32 %v393, 7
        %v395 = vsub.s32 0, %v394
        %v396 = vrot.slane %v391, %v395
        %v397 = vlaneseq
        %v398 = vshrl.u32 %v397, 7
        %v399 = vsub.s32 1, %v398
        %v400 = vrot.slane %v391, %v399
        %403 = vmatprep.subr.mxu0 %v390
        %404 = vmatpush1.msra.mxu0 %v389
        %405 = vmatprep.subr.mxu0 %v388
        %406 = vmatpush1.msra.mxu0 %v387
        %407 = vmatprep.subr.mxu0 %v386
        %408 = vmatpush1.msra.mxu0 %v385
        %409 = vmatprep.subr.mxu0 %v384
        %410 = vmatpush1.msra.mxu0 %v383
        %411 = vmatprep.subr.mxu0 %v382
        %412 = vmatpush1.msra.mxu0 %v381
        %413 = vmatprep.subr.mxu0 %v380
        %414 = vmatpush1.msra.mxu0 %v379
        %415 = vmatprep.subr.mxu0 %v378
        %416 = vmatpush1.msra.mxu0 %v377
        %417 = vmatprep.subr.mxu0 %v376
        %418 = vmatpush1.msra.mxu0 %v375
        %419 = vmatprep.subr.mxu0 %v374
        %420 = vmatpush1.msra.mxu0 %v373
        %421 = vmatprep.subr.mxu0 %v372
        %422 = vmatpush1.msra.mxu0 %v371
        %423 = vmatprep.subr.mxu0 %v370
        %424 = vmatpush1.msra.mxu0 %v369
        %425 = vmatprep.subr.mxu0 %v368
        %426 = vmatpush1.msra.mxu0 %v367
        %427 = vmatprep.subr.mxu0 %v366
        %428 = vmatpush1.msra.mxu0 %v365
        %429 = vmatprep.subr.mxu0 %v364
        %430 = vmatpush1.msra.mxu0 %v363
        %431 = vmatprep.subr.mxu0 %v362
        %432 = vmatpush1.msra.mxu0 %v361
        %433 = vmatprep.subr.mxu0 %v360
        %434 = vmatpush1.msra.mxu0 %v359
        %435 = vmatprep.subr.mxu0 0.0
        %436 = vmatpush2.msra.mxu0 0.0
        %437 = vmatprep.subr.mxu0 0.0
        %438 = vmatpush2.msra.mxu0 0.0
        %439 = vmatprep.subr.mxu0 0.0
        %440 = vmatpush2.msra.mxu0 0.0
        %441 = vmatprep.subr.mxu0 0.0
        %442 = vmatpush2.msra.mxu0 0.0
        %443 = vmatprep.subr.mxu0 0.0
        %444 = vmatpush2.msra.mxu0 0.0
        %445 = vmatprep.subr.mxu0 0.0
        %446 = vmatpush2.msra.mxu0 0.0
        %447 = vmatprep.subr.mxu0 0.0
        %448 = vmatpush2.msra.mxu0 0.0
        %449 = vmatprep.subr.mxu0 0.0
        %450 = vmatpush2.msra.mxu0 0.0
        %451 = vmatprep.subr.mxu0 0.0
        %452 = vmatpush2.msra.mxu0 0.0
        %453 = vmatprep.subr.mxu0 0.0
        %454 = vmatpush2.msra.mxu0 0.0
        %455 = vmatprep.subr.mxu0 0.0
        %456 = vmatpush2.msra.mxu0 0.0
        %457 = vmatprep.subr.mxu0 0.0
        %458 = vmatpush2.msra.mxu0 0.0
        %459 = vmatprep.subr.mxu0 0.0
        %460 = vmatpush2.msra.mxu0 0.0
        %461 = vmatprep.subr.mxu0 0.0
        %462 = vmatpush2.msra.mxu0 0.0
        %463 = vmatprep.subr.mxu0 0.0
        %464 = vmatpush2.msra.mxu0 0.0
        %465 = vmatprep.subr.mxu0 0.0
        %466 = vmatpush2.msra.mxu0 0.0
        %467 = vmatprep.mubr.f32.mxu0 0.0
        %468 = vmatmul.mubr.f32.gmra.mxu0 %v357
        %v469 = vpop.f32.mrf.mxu0
        %v470 = vadd.f32 %v396, %v469
        %v471 = vpop.f32.mrf.mxu0
        %v472 = vadd.f32 %v400, %v471
        %473 = vmatprep.mubr.f32.mxu0 0.0
        %474 = vmatmul.mubr.f32.gmra.mxu0 %v358
        %v475 = vpop.f32.mrf.mxu0
        %v476 = vadd.f32 %v396, %v475
        %v477 = vpop.f32.mrf.mxu0
        %v478 = vadd.f32 %v400, %v477
        %479 = vdwg.mxu0
        %v480 = vmul.f32 %v470, 0.5
        %v481 = vmul.f32 %v472, 0.5
        %v482 = vmul.f32 %v476, 0.5
        %v483 = vmul.f32 %v478, 0.5
        %v484 = vmul.f32 %v470, 0.70710677
        %v485 = vmul.f32 %v472, 0.70710677
        %v486 = vmul.f32 %v476, 0.70710677
        %v487 = vmul.f32 %v478, 0.70710677
        %v488 = verf.f32.pop %v484
        %v489 = verf.f32.pop %v485
        %v490 = verf.f32.pop %v486
        %v491 = verf.f32.pop %v487
        %v492 = vadd.f32 %v488, 1.0
        %v493 = vadd.f32 %v489, 1.0
        %v494 = vadd.f32 %v490, 1.0
        %v495 = vadd.f32 %v491, 1.0
        %v496 = vmul.f32 %v480, %v492
        %v497 = vmul.f32 %v481, %v493
        %v498 = vmul.f32 %v482, %v494
        %v499 = vmul.f32 %v483, %v495
        %v500 = vld [vmem:[#allocation2] sm:$0xff]
        %v501 = vld [vmem:[#allocation2 + $0x8] sm:$0xff]
        %v502 = vld [vmem:[%s314] sm:$0xff]
        %v503 = vld [vmem:[%s314 + $0x8] sm:$0xff]
        %v504 = vld [vmem:[%s314 + $0x10] sm:$0xff]
        %v505 = vld [vmem:[%s314 + $0x18] sm:$0xff]
        %v506 = vld [vmem:[%s314 + $0x20] sm:$0xff]
        %v507 = vld [vmem:[%s314 + $0x28] sm:$0xff]
        %v508 = vld [vmem:[%s314 + $0x30] sm:$0xff]
        %v509 = vld [vmem:[%s314 + $0x38] sm:$0xff]
        %v510 = vld [vmem:[%s314 + $0x40] sm:$0xff]
        %v511 = vld [vmem:[%s314 + $0x48] sm:$0xff]
        %v512 = vld [vmem:[%s314 + $0x50] sm:$0xff]
        %v513 = vld [vmem:[%s314 + $0x58] sm:$0xff]
        %v514 = vld [vmem:[%s314 + $0x60] sm:$0xff]
        %v515 = vld [vmem:[%s314 + $0x68] sm:$0xff]
        %v516 = vld [vmem:[%s314 + $0x70] sm:$0xff]
        %v517 = vld [vmem:[%s314 + $0x78] sm:$0xff]
        %v518 = vld [vmem:[%s314 + $0x80] sm:$0xff]
        %v519 = vld [vmem:[%s314 + $0x88] sm:$0xff]
        %v520 = vld [vmem:[%s314 + $0x90] sm:$0xff]
        %v521 = vld [vmem:[%s314 + $0x98] sm:$0xff]
        %v522 = vld [vmem:[%s314 + $0xa0] sm:$0xff]
        %v523 = vld [vmem:[%s314 + $0xa8] sm:$0xff]
        %v524 = vld [vmem:[%s314 + $0xb0] sm:$0xff]
        %v525 = vld [vmem:[%s314 + $0xb8] sm:$0xff]
        %v526 = vld [vmem:[%s314 + $0xc0] sm:$0xff]
        %v527 = vld [vmem:[%s314 + $0xc8] sm:$0xff]
        %v528 = vld [vmem:[%s314 + $0xd0] sm:$0xff]
        %v529 = vld [vmem:[%s314 + $0xd8] sm:$0xff]
        %v530 = vld [vmem:[%s314 + $0xe0] sm:$0xff]
        %v531 = vld [vmem:[%s314 + $0xe8] sm:$0xff]
        %v532 = vld [vmem:[%s314 + $0xf0] sm:$0xff]
        %v533 = vld [vmem:[%s314 + $0xf8] sm:$0xff]
        %534 = vmatprep.subr.mxu0 0.0
        %535 = vmatpush1.msra.mxu0 %v517
        %536 = vmatprep.subr.mxu0 0.0
        %537 = vmatpush1.msra.mxu0 %v516
        %538 = vmatprep.subr.mxu0 0.0
        %539 = vmatpush1.msra.mxu0 %v515
        %540 = vmatprep.subr.mxu0 0.0
        %541 = vmatpush1.msra.mxu0 %v514
        %542 = vmatprep.subr.mxu0 0.0
        %543 = vmatpush1.msra.mxu0 %v513
        %544 = vmatprep.subr.mxu0 0.0
        %545 = vmatpush1.msra.mxu0 %v512
        %546 = vmatprep.subr.mxu0 0.0
        %547 = vmatpush1.msra.mxu0 %v511
        %548 = vmatprep.subr.mxu0 0.0
        %549 = vmatpush1.msra.mxu0 %v510
        %550 = vmatprep.subr.mxu0 0.0
        %551 = vmatpush1.msra.mxu0 %v509
        %552 = vmatprep.subr.mxu0 0.0
        %553 = vmatpush1.msra.mxu0 %v508
        %554 = vmatprep.subr.mxu0 0.0
        %555 = vmatpush1.msra.mxu0 %v507
        %556 = vmatprep.subr.mxu0 0.0
        %557 = vmatpush1.msra.mxu0 %v506
        %558 = vmatprep.subr.mxu0 0.0
        %559 = vmatpush1.msra.mxu0 %v505
        %560 = vmatprep.subr.mxu0 0.0
        %561 = vmatpush1.msra.mxu0 %v504
        %562 = vmatprep.subr.mxu0 0.0
        %563 = vmatpush1.msra.mxu0 %v503
        %564 = vmatprep.subr.mxu0 0.0
        %565 = vmatpush1.msra.mxu0 %v502
        %566 = vmatprep.subr.mxu0 0.0
        %567 = vmatpush2.msra.mxu0 %v533
        %568 = vmatprep.subr.mxu0 0.0
        %569 = vmatpush2.msra.mxu0 %v532
        %570 = vmatprep.subr.mxu0 0.0
        %571 = vmatpush2.msra.mxu0 %v531
        %572 = vmatprep.subr.mxu0 0.0
        %573 = vmatpush2.msra.mxu0 %v530
        %574 = vmatprep.subr.mxu0 0.0
        %575 = vmatpush2.msra.mxu0 %v529
        %576 = vmatprep.subr.mxu0 0.0
        %577 = vmatpush2.msra.mxu0 %v528
        %578 = vmatprep.subr.mxu0 0.0
        %579 = vmatpush2.msra.mxu0 %v527
        %580 = vmatprep.subr.mxu0 0.0
        %581 = vmatpush2.msra.mxu0 %v526
        %582 = vmatprep.subr.mxu0 0.0
        %583 = vmatpush2.msra.mxu0 %v525
        %584 = vmatprep.subr.mxu0 0.0
        %585 = vmatpush2.msra.mxu0 %v524
        %586 = vmatprep.subr.mxu0 0.0
        %587 = vmatpush2.msra.mxu0 %v523
        %588 = vmatprep.subr.mxu0 0.0
        %589 = vmatpush2.msra.mxu0 %v522
        %590 = vmatprep.subr.mxu0 0.0
        %591 = vmatpush2.msra.mxu0 %v521
        %592 = vmatprep.subr.mxu0 0.0
        %593 = vmatpush2.msra.mxu0 %v520
        %594 = vmatprep.subr.mxu0 0.0
        %595 = vmatpush2.msra.mxu0 %v519
        %596 = vmatprep.subr.mxu0 0.0
        %597 = vmatpush2.msra.mxu0 %v518
        %598 = vmatprep.mubr.f32.mxu0 %v497
        %599 = vmatmul.mubr.f32.gmra.mxu0 %v496
        %v600 = vpop.f32.mrf.mxu0
        %v601 = vadd.f32 0.0, %v600
        %v602 = vpop.f32.mrf.mxu0
        %603 = vmatprep.mubr.f32.mxu0 %v499
        %604 = vmatmul.mubr.f32.gmra.mxu0 %v498
        %v605 = vpop.f32.mrf.mxu0
        %v606 = vadd.f32 0.0, %v605
        %v607 = vpop.f32.mrf.mxu0
        %608 = vdwg.mxu0
        %v609 = vadd.f32 %v500, %v601
        %v610 = vadd.f32 %v501, %v606
        %611 = vst [vmem:[#allocation2] sm:$0xff] %v609
        %612 = vst [vmem:[#allocation2 + $0x8] sm:$0xff] %v610
        %p613 = scmp.eq.s32.totalorder %s29, 1
        // Predicated region
        $region61: #{tpu_custom_call.1} parent=39 // pred_check
          %p614 = pneg %p613
        $region62: #{tpu_custom_call.1} parent=39 // pred_check_branch
          %616 = sbr.rel (%p614) target = $region64
        $region63: #{tpu_custom_call.1} parent=39 // pred_region
          %v617 = vld [vmem:[#allocation2] sm:$0xff]
          %v618 = vld [vmem:[#allocation2 + $0x8] sm:$0xff]
          %v619 = vld [vmem:[%s4] sm:$0x1]
          %v621 = vlaneseq
          %v622 = vshrl.u32 %v621, 7
          %v623 = vsub.s32 0, %v622
          %v624 = vrot.slane %v619, %v623
          %v626 = vadd.f32 %v617, %v624
          %v627 = vadd.f32 %v618, %v624
          %628 = vst [vmem:[#allocation11] sm:$0xff] %v626
          %629 = vst [vmem:[#allocation11 + $0x8] sm:$0xff] %v627
        $region64: #{tpu_custom_call.1} parent=39 // pred_fallthru
          _
        // Predicated region
        $region65: #{tpu_custom_call.1} parent=39 // pred_check
          %p630 = pneg %p179
        $region66: #{tpu_custom_call.1} parent=39 // pred_check_branch
          %632 = sbr.rel (%p630) target = $region68
        $region67: #{tpu_custom_call.1} parent=39 // pred_region
          %s633 = smul.u32 2, %s28
          %s635 = ssub.s32 256, 256
          %636 = vsyncadd [#allocation5], %s635
          %s637 = smul.addr %s633, 128
          %s638 = scalar_lea.hbm %s5, %s637
          %s639 = sshll.u32 [#allocation11], 4
          %s640 = int_to_ptr.vmem [resolvable:$true] %s639
          %645 = dma.vmem_to_hbm [thread:$0]  %s640, 256, %s638, [#allocation5], 128, 128, 8
        $region68: #{tpu_custom_call.1} parent=39 // pred_fallthru
          _
        // Predicated region
        $region69: #{tpu_custom_call.1} parent=39 // pred_check
          %p646 = pneg %p179
        $region70: #{tpu_custom_call.1} parent=39 // pred_check_branch
          %648 = sbr.rel (%p646) target = $region72
        $region71: #{tpu_custom_call.1} parent=39 // pred_region
          %649 = dma.done [#allocation5], 256
        $region72: #{tpu_custom_call.1} parent=39 // pred_fallthru
          _
      $region40: #{tpu_custom_call.1} parent=5 // pred_fallthru
        _
      %p650 = scmp.le.s32.totalorder 2, %s19
      // Predicated region
      $region73: #{tpu_custom_call.1} parent=5 // pred_check
        %p651 = pneg %p650
      $region74: #{tpu_custom_call.1} parent=5 // pred_check_branch
        %653 = sbr.rel (%p651) target = $region76
      $region75: #{tpu_custom_call.1} parent=5 // pred_region
        %s654 = ssub.s32 %s19, 2
      $region76: #{tpu_custom_call.1} parent=5 // pred_fallthru
        _
    $region6: #{tpu_custom_call.1} parent=1 // loop_footer
      %s23 = sadd.s32 1, %s19
    $region7: #{tpu_custom_call.1} parent=1 // loop_footer_branch
      %18 = sbr.rel target = $region3
    $region8: #{tpu_custom_call.1} parent=1 // loop_exit
      _
    %655 = vsyncpa [#allocation4], 1
    %s656 = scalar_lea.sflag [#allocation4], 1
    %657 = vsyncpa %s656, 1
    %658 = vsyncpa [#allocation7], 1
    %s659 = scalar_lea.sflag [#allocation7], 1
    %660 = vsyncpa %s659, 1
    %661 = vsyncpa [#allocation10], 1
    %s662 = scalar_lea.sflag [#allocation10], 1
    %663 = vsyncpa %s662, 1
    %664 = vsyncpa [#allocation5], 1
    %s665 = scalar_lea.sflag [#allocation5], 1
    %666 = vsyncpa %s665, 1

</llo_original>
